<compile_context>
chip_gen: v5e
topology: v5e:2x2
jax: 0.10.0
libtpu: 0.0.40
codegen_flags: <defaults>
</compile_context>

<pallas_src>
import functools

import jax
import jax.numpy as jnp
import numpy as np
from jax.experimental import pallas as pl
from jax.experimental.pallas import tpu as pltpu


def _pick_tile(n, candidates):
    """Largest candidate tile that evenly divides n, else the full extent."""
    for c in candidates:
        if c <= n and n % c == 0:
            return c
    return n


# ----------------------------------------------------------------------------
# Kernel 1: fused q/k/v 1x1x1 projections, channels-first, tiled over positions
# ----------------------------------------------------------------------------
def _qkv_proj_kernel(q_ref, k_ref, v_ref, w_ref, b_ref, oq_ref, ok_ref, ov_ref):
    # 1x1x1 Conv3d in channels-first layout: out[c_out, p] = sum_c W[c, c_out] x[c, p] + b.
    # Three projections per grid step -> each activation tile is read from HBM once.
    oq_ref[0] = jnp.dot(w_ref[0], q_ref[0], preferred_element_type=jnp.float32) + b_ref[0]
    ok_ref[0] = jnp.dot(w_ref[1], k_ref[0], preferred_element_type=jnp.float32) + b_ref[1]
    ov_ref[0] = jnp.dot(w_ref[2], v_ref[0], preferred_element_type=jnp.float32) + b_ref[2]


def qkv_projection(q, k, v, wqkv_t, bqkv):
    """q/k/v: (N, C, P) f32; wqkv_t: (3, C, C) (each W^T); bqkv: (3, C, 1)."""
    N, C, P = q.shape
    tp = _pick_tile(P, (1024, 512, 256, 128))
    x_spec = pl.BlockSpec((1, C, tp), lambda n, i: (n, 0, i))
    out_sd = jax.ShapeDtypeStruct((N, C, P), jnp.float32)
    return pl.pallas_call(
        _qkv_proj_kernel,
        out_shape=(out_sd, out_sd, out_sd),
        grid=(N, P // tp),
        in_specs=[
            x_spec, x_spec, x_spec,
            pl.BlockSpec((3, C, C), lambda n, i: (0, 0, 0)),   # resident weights
            pl.BlockSpec((3, C, 1), lambda n, i: (0, 0, 0)),   # resident biases
        ],
        out_specs=(x_spec, x_spec, x_spec),
        compiler_params=pltpu.CompilerParams(
            dimension_semantics=("parallel", "parallel")),
    )(q, k, v, wqkv_t, bqkv)


# ----------------------------------------------------------------------------
# Kernel 2: grid attention + head merge + output 1x1x1 conv, query-tiled
# ----------------------------------------------------------------------------
def _grid_attn_kernel(q_ref, k_ref, v_ref, wo_ref, bo_ref, o_ref, *,
                      T, H, W, num_heads, projdim):
    P = T * H * W
    Pq = q_ref.shape[2]
    qi = pl.program_id(1)

    # Grid-neighbor additive bias built in-kernel (no HBM (P,P) mask).
    # keep[j, i] is True iff key position j shares a W-row, H-column or temporal
    # line with query position qi*Pq + i (center kept exactly once => T+H+W-2
    # active keys per query).  Coordinates are computed on thin (P,1)/(1,Pq)
    # vectors; only the comparisons broadcast to (P, Pq).
    j = jax.lax.broadcasted_iota(jnp.int32, (P, 1), 0)
    i = jax.lax.broadcasted_iota(jnp.int32, (1, Pq), 1) + qi * Pq
    tj, hj, wj = j // (H * W), (j // W) % H, j % W
    ti, hi, wi = i // (H * W), (i // W) % H, i % W
    same_t, same_h, same_w = tj == ti, hj == hi, wj == wi
    keep = (same_t & same_h) | (same_w & (same_t | same_h))
    neg = jnp.float32(-1e30)   # f32 softmax => exp(-1e30 - m) underflows to exactly 0
    bias = jnp.where(keep, jnp.float32(0.0), neg)                  # (P, Pq)

    qb = q_ref[0]   # (C, Pq)
    kb = k_ref[0]   # (C, P)
    vb = v_ref[0]   # (C, P)

    outs = []
    for h in range(num_heads):             # static unroll, channel-major head split
        sl = slice(h * projdim, (h + 1) * projdim)
        q_h, k_h, v_h = qb[sl, :], kb[sl, :], vb[sl, :]     # (Cp, Pq/P/P)
        # scores s[j, i] = <k_j, q_i>: keys on sublanes, queries on lanes.
        s = jax.lax.dot_general(k_h, q_h, (((0,), (0,)), ((), ())),
                                preferred_element_type=jnp.float32)   # (P, Pq)
        s = s + bias
        m = jnp.max(s, axis=0, keepdims=True)                          # (1, Pq)
        p = jnp.exp(s - m)
        l = jnp.sum(p, axis=0, keepdims=True)                          # (1, Pq)
        o_h = jnp.dot(v_h, p, preferred_element_type=jnp.float32)      # (Cp, Pq)
        # normalize the small (Cp, Pq) output instead of scaling (P, Pq) weights;
        # approx reciprocal goes to the EUP slot (effectively free).
        outs.append(o_h * pl.reciprocal(l, approx=True))
    att = jnp.concatenate(outs, axis=0)                                # (C, Pq)

    # fused output 1x1x1 conv (lane-dense store, last dim = Pq)
    o_ref[0] = jnp.dot(wo_ref[...], att, preferred_element_type=jnp.float32) + bo_ref[...]


def grid_attention(qp, kp, vp, wo_t, bo, *, T, H, W, num_heads):
    """qp/kp/vp: (N, C, P) f32 projected tensors; wo_t: (C, C) = Wo^T; bo: (C,)."""
    N, C, P = qp.shape
    assert P == T * H * W
    projdim = C // num_heads
    pq = _pick_tile(P, (128, 256, 512))     # bound live (P, Pq) intermediates / VMEM
    kernel = functools.partial(_grid_attn_kernel, T=T, H=H, W=W,
                               num_heads=num_heads, projdim=projdim)
    return pl.pallas_call(
        kernel,
        out_shape=jax.ShapeDtypeStruct((N, C, P), jnp.float32),
        grid=(N, P // pq),
        in_specs=[
            pl.BlockSpec((1, C, pq), lambda n, i: (n, 0, i)),   # queries: tiled
            pl.BlockSpec((1, C, P), lambda n, i: (n, 0, 0)),    # keys: resident per batch
            pl.BlockSpec((1, C, P), lambda n, i: (n, 0, 0)),    # values: resident per batch
            pl.BlockSpec((C, C), lambda n, i: (0, 0)),          # Wo^T (resident)
            pl.BlockSpec((C, 1), lambda n, i: (0, 0)),          # bo   (resident)
        ],
        out_specs=pl.BlockSpec((1, C, pq), lambda n, i: (n, 0, i)),
        compiler_params=pltpu.CompilerParams(
            dimension_semantics=("parallel", "parallel")),
    )(qp, kp, vp, wo_t, bo.reshape(C, 1))


# ----------------------------------------------------------------------------
# Module glue: parameters, forward
# ----------------------------------------------------------------------------
def _sinusoidal_pe(max_len, d_model):
    position = np.arange(max_len, dtype=np.float32)[:, None]
    div_term = np.exp(np.arange(0, d_model, 2, dtype=np.float32)
                      * (-np.log(100.0) / d_model))
    pe = np.zeros((max_len, d_model), dtype=np.float32)
    pe[:, 0::2] = np.sin(position * div_term)
    pe[:, 1::2] = np.cos(position * div_term)
    return jnp.asarray(pe)


class GridAttentionPallas:
    """JAX/Pallas port of GridAttention (forward only)."""

    def __init__(self, in_dim, num_heads, H, W, max_frame_count, key):
        assert in_dim % num_heads == 0
        self.in_dim = in_dim
        self.num_heads = num_heads
        self.projdim = in_dim // num_heads

        ks = jax.random.split(key, 8)
        scale = 0.1

        def conv_params(kw, kb):
            w = scale * jax.random.normal(kw, (in_dim, in_dim), jnp.float32)
            b = scale * jax.random.normal(kb, (in_dim,), jnp.float32)
            return w, b

        self.wq, self.bq = conv_params(ks[0], ks[1])   # query_conv
        self.wk, self.bk = conv_params(ks[2], ks[3])   # key_conv
        self.wv, self.bv = conv_params(ks[4], ks[5])   # value_conv
        self.wo, self.bo = conv_params(ks[6], ks[7])   # outconv

        # TODO(synk): the reference GridAttnWeightFunc.forward only consumes
        # (query, key); x/y/t relative embeddings + frm_indices have no defined
        # semantics in the provided source (CUDA kernel not given), so they are
        # initialized for shape fidelity but unused.
        self.x_embeddings = jnp.zeros((2 * W - 1, self.projdim), jnp.float32)
        self.y_embeddings = jnp.zeros((2 * H - 1, self.projdim), jnp.float32)
        self.t_embeddings = _sinusoidal_pe(2 * max_frame_count - 1, self.projdim)

    def params(self):
        return dict(wq=self.wq, bq=self.bq, wk=self.wk, bk=self.bk,
                    wv=self.wv, bv=self.bv, wo=self.wo, bo=self.bo)

    def __call__(self, query, key, value, frm_indices):
        # query/key/value: (N, C, T, H, W) float32 (NCTHW, like PyTorch).
        N, C, T, H, W = value.shape
        assert query.shape == key.shape == value.shape
        assert frm_indices.shape[0] == N and frm_indices.shape[1] == T
        P = T * H * W

        # NCTHW -> channels-first (N, C, P): pure reshape, no transpose.
        q3 = query.reshape(N, C, P).astype(jnp.float32)
        k3 = key.reshape(N, C, P).astype(jnp.float32)
        v3 = value.reshape(N, C, P).astype(jnp.float32)

        wqkv_t = jnp.stack([self.wq.T, self.wk.T, self.wv.T]).astype(jnp.float32)  # (3,C,C)
        bqkv = jnp.stack([self.bq, self.bk, self.bv]).reshape(3, C, 1).astype(jnp.float32)

        qp, kp, vp = qkv_projection(q3, k3, v3, wqkv_t, bqkv)          # (N,C,P) each

        out = grid_attention(qp, kp, vp,
                             self.wo.T.astype(jnp.float32),
                             self.bo.astype(jnp.float32),
                             T=T, H=H, W=W, num_heads=self.num_heads)  # (N,C,P)
        return out.reshape(N, C, T, H, W)


# ----------------------------------------------------------------------------
# Pure-JAX reference (axial formulation) for validation
# ----------------------------------------------------------------------------
def reference_forward(params, query, key, value, num_heads):
    N, C, T, H, W = value.shape
    pd = C // num_heads

    def conv(x, w, b):
        return jnp.einsum("ncthw,cd->ndthw", x, w) + b[None, :, None, None, None]

    def heads(x):
        return x.reshape(N * num_heads, pd, T, H, W)

    q = heads(conv(query, params["wq"], params["bq"]))
    k = heads(conv(key, params["wk"], params["bk"]))
    v = heads(conv(value, params["wv"], params["bv"]))

    e_w = jnp.einsum("bcthw,bcthv->bthwv", q, k)   # along W (includes center)
    e_h = jnp.einsum("bcthw,bctgw->bthwg", q, k)   # along H
    e_t = jnp.einsum("bcthw,bcshw->bthws", q, k)   # along T
    e_h = jnp.where(jnp.eye(H, dtype=bool)[None, None, :, None, :], -jnp.inf, e_h)
    e_t = jnp.where(jnp.eye(T, dtype=bool)[None, :, None, None, :], -jnp.inf, e_t)

    cat = jnp.concatenate([e_w, e_h, e_t], axis=-1)      # (B,T,H,W, T+H+W), 2x -inf
    p = jax.nn.softmax(cat, axis=-1)
    p_w, p_h, p_t = p[..., :W], p[..., W:W + H], p[..., W + H:]

    out = (jnp.einsum("bthwv,bcthv->bcthw", p_w, v)
           + jnp.einsum("bthwg,bctgw->bcthw", p_h, v)
           + jnp.einsum("bthws,bcshw->bcthw", p_t, v))
    out = out.reshape(N, C, T, H, W)
    return conv(out, params["wo"], params["bo"])


# ----------------------------------------------------------------------------
if __name__ == "__main__":
    N, C, T, H, W = 2, 8, 4, 8, 8
    num_heads = 2
    max_frame_count = 8

    root = jax.random.PRNGKey(0)
    k_mod, k_q, k_k, k_v = jax.random.split(root, 4)

    module = GridAttentionPallas(C, num_heads, H, W, max_frame_count, k_mod)

    query = jax.random.normal(k_q, (N, C, T, H, W), jnp.float32)
    key = jax.random.normal(k_k, (N, C, T, H, W), jnp.float32)
    value = jax.random.normal(k_v, (N, C, T, H, W), jnp.float32)
    frm_indices = jnp.broadcast_to(jnp.arange(T, dtype=jnp.int32), (N, T))

    out = jax.block_until_ready(module(query, key, value, frm_indices))
    assert out.shape == (N, C, T, H, W) and out.dtype == jnp.float32

    ref = jax.block_until_ready(
        reference_forward(module.params(), query, key, value, num_heads))
    # Native (single-pass) MXU precision on both paths -> relaxed tolerance.
    np.testing.assert_allclose(np.asarray(out), np.asarray(ref), atol=2e-2, rtol=2e-2)

    print("KERNEL_OK")
</pallas_src>

<mosaic_0001>
module attributes {stable_mosaic.version = 11 : i64} {
  func.func @_qkv_proj_kernel(%arg0: i32, %arg1: i32, %arg2: memref<1x8x256xf32, #tpu.memory_space<vmem>>, %arg3: memref<1x8x256xf32, #tpu.memory_space<vmem>>, %arg4: memref<1x8x256xf32, #tpu.memory_space<vmem>>, %arg5: memref<3x8x8xf32, #tpu.memory_space<vmem>>, %arg6: memref<3x8x1xf32, #tpu.memory_space<vmem>>, %arg7: memref<1x8x256xf32, #tpu.memory_space<vmem>>, %arg8: memref<1x8x256xf32, #tpu.memory_space<vmem>>, %arg9: memref<1x8x256xf32, #tpu.memory_space<vmem>>) attributes {dimension_semantics = [#tpu.dimension_semantics<parallel>, #tpu.dimension_semantics<parallel>], iteration_bounds = array<i64: 2, 1>, scalar_prefetch = 0 : i64, scratch_operands = 0 : i64, tpu.core_type = #tpu.core_type<tc>, window_params = [{transform_indices = @transform_0, window_bounds = array<i64: 1, 8, 256>}, {transform_indices = @transform_1, window_bounds = array<i64: 1, 8, 256>}, {transform_indices = @transform_2, window_bounds = array<i64: 1, 8, 256>}, {pipeline_mode = #tpu.pipeline_mode<synchronous>, transform_indices = @transform_3, window_bounds = array<i64: 3, 8, 8>}, {pipeline_mode = #tpu.pipeline_mode<synchronous>, transform_indices = @transform_4, window_bounds = array<i64: 3, 8, 1>}, {transform_indices = @transform_5, window_bounds = array<i64: 1, 8, 256>}, {transform_indices = @transform_6, window_bounds = array<i64: 1, 8, 256>}, {transform_indices = @transform_7, window_bounds = array<i64: 1, 8, 256>}]} {
    %c0 = arith.constant 0 : index
    %c0_0 = arith.constant 0 : index
    %c0_1 = arith.constant 0 : index
    %0 = vector.load %arg5[%c0, %c0_0, %c0_1] : memref<3x8x8xf32, #tpu.memory_space<vmem>>, vector<1x8x8xf32>
    %1 = vector.shape_cast %0 : vector<1x8x8xf32> to vector<8x8xf32>
    %c0_2 = arith.constant 0 : index
    %c0_3 = arith.constant 0 : index
    %c0_4 = arith.constant 0 : index
    %2 = vector.load %arg2[%c0_2, %c0_3, %c0_4] : memref<1x8x256xf32, #tpu.memory_space<vmem>>, vector<1x8x256xf32>
    %3 = vector.shape_cast %2 : vector<1x8x256xf32> to vector<8x256xf32>
    %cst = arith.constant dense<0.000000e+00> : vector<8x256xf32>
    %4 = tpu.matmul %1, %3, %cst {dimension_numbers = #tpu.dot_dimension_numbers<[1], [0], [0], [1], [0, 0, 1, 1], [], []>} : vector<8x8xf32>, vector<8x256xf32>, vector<8x256xf32> -> vector<8x256xf32>
    %c0_5 = arith.constant 0 : index
    %c0_6 = arith.constant 0 : index
    %c0_7 = arith.constant 0 : index
    %5 = vector.load %arg6[%c0_5, %c0_6, %c0_7] : memref<3x8x1xf32, #tpu.memory_space<vmem>>, vector<1x8x1xf32>
    %6 = vector.shape_cast %5 : vector<1x8x1xf32> to vector<8x1xf32>
    %7 = vector.broadcast %6 : vector<8x1xf32> to vector<8x256xf32>
    %8 = arith.addf %4, %7 : vector<8x256xf32>
    %c0_8 = arith.constant 0 : index
    %c0_9 = arith.constant 0 : index
    %c0_10 = arith.constant 0 : index
    %9 = vector.load %arg7[%c0_8, %c0_9, %c0_10] : memref<1x8x256xf32, #tpu.memory_space<vmem>>, vector<1x8x256xf32>
    %10 = vector.shape_cast %9 : vector<1x8x256xf32> to vector<8x256xf32>
    %11 = vector.shape_cast %8 : vector<8x256xf32> to vector<1x8x256xf32>
    tpu.vector_store %arg7[%c0_8, %c0_9, %c0_10], %11 {strides = array<i32>} : memref<1x8x256xf32, #tpu.memory_space<vmem>>, vector<1x8x256xf32>,
    %c1 = arith.constant 1 : index
    %c0_11 = arith.constant 0 : index
    %c0_12 = arith.constant 0 : index
    %12 = vector.load %arg5[%c1, %c0_11, %c0_12] : memref<3x8x8xf32, #tpu.memory_space<vmem>>, vector<1x8x8xf32>
    %13 = vector.shape_cast %12 : vector<1x8x8xf32> to vector<8x8xf32>
    %c0_13 = arith.constant 0 : index
    %c0_14 = arith.constant 0 : index
    %c0_15 = arith.constant 0 : index
    %14 = vector.load %arg3[%c0_13, %c0_14, %c0_15] : memref<1x8x256xf32, #tpu.memory_space<vmem>>, vector<1x8x256xf32>
    %15 = vector.shape_cast %14 : vector<1x8x256xf32> to vector<8x256xf32>
    %cst_16 = arith.constant dense<0.000000e+00> : vector<8x256xf32>
    %16 = tpu.matmul %13, %15, %cst_16 {dimension_numbers = #tpu.dot_dimension_numbers<[1], [0], [0], [1], [0, 0, 1, 1], [], []>} : vector<8x8xf32>, vector<8x256xf32>, vector<8x256xf32> -> vector<8x256xf32>
    %c1_17 = arith.constant 1 : index
    %c0_18 = arith.constant 0 : index
    %c0_19 = arith.constant 0 : index
    %17 = vector.load %arg6[%c1_17, %c0_18, %c0_19] : memref<3x8x1xf32, #tpu.memory_space<vmem>>, vector<1x8x1xf32>
    %18 = vector.shape_cast %17 : vector<1x8x1xf32> to vector<8x1xf32>
    %19 = vector.broadcast %18 : vector<8x1xf32> to vector<8x256xf32>
    %20 = arith.addf %16, %19 : vector<8x256xf32>
    %c0_20 = arith.constant 0 : index
    %c0_21 = arith.constant 0 : index
    %c0_22 = arith.constant 0 : index
    %21 = vector.load %arg8[%c0_20, %c0_21, %c0_22] : memref<1x8x256xf32, #tpu.memory_space<vmem>>, vector<1x8x256xf32>
    %22 = vector.shape_cast %21 : vector<1x8x256xf32> to vector<8x256xf32>
    %23 = vector.shape_cast %20 : vector<8x256xf32> to vector<1x8x256xf32>
    tpu.vector_store %arg8[%c0_20, %c0_21, %c0_22], %23 {strides = array<i32>} : memref<1x8x256xf32, #tpu.memory_space<vmem>>, vector<1x8x256xf32>,
    %c2 = arith.constant 2 : index
    %c0_23 = arith.constant 0 : index
    %c0_24 = arith.constant 0 : index
    %24 = vector.load %arg5[%c2, %c0_23, %c0_24] : memref<3x8x8xf32, #tpu.memory_space<vmem>>, vector<1x8x8xf32>
    %25 = vector.shape_cast %24 : vector<1x8x8xf32> to vector<8x8xf32>
    %c0_25 = arith.constant 0 : index
    %c0_26 = arith.constant 0 : index
    %c0_27 = arith.constant 0 : index
    %26 = vector.load %arg4[%c0_25, %c0_26, %c0_27] : memref<1x8x256xf32, #tpu.memory_space<vmem>>, vector<1x8x256xf32>
    %27 = vector.shape_cast %26 : vector<1x8x256xf32> to vector<8x256xf32>
    %cst_28 = arith.constant dense<0.000000e+00> : vector<8x256xf32>
    %28 = tpu.matmul %25, %27, %cst_28 {dimension_numbers = #tpu.dot_dimension_numbers<[1], [0], [0], [1], [0, 0, 1, 1], [], []>} : vector<8x8xf32>, vector<8x256xf32>, vector<8x256xf32> -> vector<8x256xf32>
    %c2_29 = arith.constant 2 : index
    %c0_30 = arith.constant 0 : index
    %c0_31 = arith.constant 0 : index
    %29 = vector.load %arg6[%c2_29, %c0_30, %c0_31] : memref<3x8x1xf32, #tpu.memory_space<vmem>>, vector<1x8x1xf32>
    %30 = vector.shape_cast %29 : vector<1x8x1xf32> to vector<8x1xf32>
    %31 = vector.broadcast %30 : vector<8x1xf32> to vector<8x256xf32>
    %32 = arith.addf %28, %31 : vector<8x256xf32>
    %c0_32 = arith.constant 0 : index
    %c0_33 = arith.constant 0 : index
    %c0_34 = arith.constant 0 : index
    %33 = vector.load %arg9[%c0_32, %c0_33, %c0_34] : memref<1x8x256xf32, #tpu.memory_space<vmem>>, vector<1x8x256xf32>
    %34 = vector.shape_cast %33 : vector<1x8x256xf32> to vector<8x256xf32>
    %35 = vector.shape_cast %32 : vector<8x256xf32> to vector<1x8x256xf32>
    tpu.vector_store %arg9[%c0_32, %c0_33, %c0_34], %35 {strides = array<i32>} : memref<1x8x256xf32, #tpu.memory_space<vmem>>, vector<1x8x256xf32>,
    return
  }
  func.func @transform_0(%arg0: i32, %arg1: i32) -> (i32, i32, i32) {
    %c0_i32 = arith.constant 0 : i32
    %c0_i32_0 = arith.constant 0 : i32
    return %arg0, %c0_i32, %arg1 : i32, i32, i32
  }
  func.func @transform_1(%arg0: i32, %arg1: i32) -> (i32, i32, i32) {
    %c0_i32 = arith.constant 0 : i32
    %c0_i32_0 = arith.constant 0 : i32
    return %arg0, %c0_i32, %arg1 : i32, i32, i32
  }
  func.func @transform_2(%arg0: i32, %arg1: i32) -> (i32, i32, i32) {
    %c0_i32 = arith.constant 0 : i32
    %c0_i32_0 = arith.constant 0 : i32
    return %arg0, %c0_i32, %arg1 : i32, i32, i32
  }
  func.func @transform_3(%arg0: i32, %arg1: i32) -> (i32, i32, i32) {
    %c0_i32 = arith.constant 0 : i32
    %c0_i32_0 = arith.constant 0 : i32
    %c0_i32_1 = arith.constant 0 : i32
    %c0_i32_2 = arith.constant 0 : i32
    return %c0_i32, %c0_i32_0, %c0_i32_1 : i32, i32, i32
  }
  func.func @transform_4(%arg0: i32, %arg1: i32) -> (i32, i32, i32) {
    %c0_i32 = arith.constant 0 : i32
    %c0_i32_0 = arith.constant 0 : i32
    %c0_i32_1 = arith.constant 0 : i32
    %c0_i32_2 = arith.constant 0 : i32
    return %c0_i32, %c0_i32_0, %c0_i32_1 : i32, i32, i32
  }
  func.func @transform_5(%arg0: i32, %arg1: i32) -> (i32, i32, i32) {
    %c0_i32 = arith.constant 0 : i32
    %c0_i32_0 = arith.constant 0 : i32
    return %arg0, %c0_i32, %arg1 : i32, i32, i32
  }
  func.func @transform_6(%arg0: i32, %arg1: i32) -> (i32, i32, i32) {
    %c0_i32 = arith.constant 0 : i32
    %c0_i32_0 = arith.constant 0 : i32
    return %arg0, %c0_i32, %arg1 : i32, i32, i32
  }
  func.func @transform_7(%arg0: i32, %arg1: i32) -> (i32, i32, i32) {
    %c0_i32 = arith.constant 0 : i32
    %c0_i32_0 = arith.constant 0 : i32
    return %arg0, %c0_i32, %arg1 : i32, i32, i32
  }
}

</mosaic_0001>

<llo_original>
// kernel: tpu_custom_call.1
$region0: #{tpu_custom_call.1}
  #allocation0 [shape = 'u32[]', space=smem, size = 0x4, offset = 0x4, fixed_abs, tag = 'smem constant byte address 0x4 - core index']
  #allocation1 [shape = 'u32[72,128]{1,0:T(1,128)}', space=vmem, size = 0x9000, scoped, tag = 'internal scratch']
  %s0 = inlined_call_operand.hbm [shape: f32[2,8,256], index: 0, kind: input, shape index: {}]
  %s1 = inlined_call_operand.hbm [shape: f32[2,8,256], index: 1, kind: input, shape index: {}]
  %s2 = inlined_call_operand.hbm [shape: f32[2,8,256], index: 2, kind: input, shape index: {}]
  %s3 = inlined_call_operand.vmem [shape: f32[3,8,8], index: 3, kind: input, shape index: {}]
  %s4 = inlined_call_operand.vmem [shape: f32[3,8,1], index: 4, kind: input, shape index: {}]
  %s5 = inlined_call_operand.hbm [shape: f32[2,8,256], index: 5, kind: output, shape index: {0}]
  %s6 = inlined_call_operand.hbm [shape: f32[2,8,256], index: 6, kind: output, shape index: {1}]
  %s7 = inlined_call_operand.hbm [shape: f32[2,8,256], index: 7, kind: output, shape index: {2}]
  %8 = xla_tuple %s5, %s6, %s7
  %s9 = sld [smem:[#allocation0]]
  $region81: #{tpu_custom_call.1} parent=0
    _
  %s11 = ssub.s32 1, %s9
  %s12 = scalar_select 0, %s11, %s9
  $region1: #{tpu_custom_call.1} parent=0
    #allocation2 [shape = 'u8[16384]{0}', space=vmem, size = 0x4000, scoped, tag = 'input window, operand 0']
    #allocation3 [shape = 's32[2]{0}', space=sflag, size = 0x8, scoped, tag = 'scoped memory for tpu_custom_call.1']
    #allocation4 [shape = 's32[2]{0}', space=sflag, size = 0x8, scoped, tag = 'scoped memory for tpu_custom_call.1']
    #allocation5 [shape = 'u8[16384]{0}', space=vmem, size = 0x4000, scoped, tag = 'input window, operand 1']
    #allocation6 [shape = 's32[2]{0}', space=sflag, size = 0x8, scoped, tag = 'scoped memory for tpu_custom_call.1']
    #allocation7 [shape = 'u8[16384]{0}', space=vmem, size = 0x4000, scoped, tag = 'input window, operand 2']
    #allocation8 [shape = 'u8[16384]{0}', space=vmem, size = 0x4000, scoped, tag = 'output window, operand 0']
    #allocation9 [shape = 'u8[16384]{0}', space=vmem, size = 0x4000, scoped, tag = 'output window, operand 1']
    #allocation10 [shape = 's32[2]{0}', space=sflag, size = 0x8, scoped, tag = 'scoped memory for tpu_custom_call.1']
    #allocation11 [shape = 'u8[16384]{0}', space=vmem, size = 0x4000, scoped, tag = 'output window, operand 2']
    %13 = vsyncpa [#allocation3], 0
    %s14 = scalar_lea.sflag [#allocation3], 1
    %15 = vsyncpa %s14, 0
    %16 = vsyncpa [#allocation6], 0
    %s17 = scalar_lea.sflag [#allocation6], 1
    %18 = vsyncpa %s17, 0
    %19 = vsyncpa [#allocation4], 0
    %s20 = scalar_lea.sflag [#allocation4], 1
    %21 = vsyncpa %s20, 0
    %22 = vsyncpa [#allocation10], 0
    %s23 = scalar_lea.sflag [#allocation10], 1
    %24 = vsyncpa %s23, 0
    loop: start=0, step=1, limit=4
    $region2: #{tpu_custom_call.1} parent=1 // loop_pre_header
      _
    $region3: #{tpu_custom_call.1} parent=1 // loop_header
      %s26 = sphi 0, %s30
      %p27 = scmp.ge.s32.totalorder %s26, 4
      %s33 = sphi 0, %s45
      %s34 = sphi 0, %s41
      %s35 = sphi 0, %s33
      %s36 = sphi 0, %s34
      %s37 = sphi 0, %s35
      %s38 = sphi 0, %s36
      %s50 = sphi 0, %s52
      %s53 = sphi 0, %s50
      %s54 = sphi 0, %s53
      %s70 = sphi 0, %s54
      %s78 = sphi 0, %s80
      %s81 = sphi 0, %s78
      %s82 = sphi 0, %s81
      %s98 = sphi 0, %s82
      %s106 = sphi 0, %s108
      %s109 = sphi 0, %s106
      %s110 = sphi 0, %s109
      %s126 = sphi 0, %s110
      %s130 = sphi 0, %s130
      %s132 = sphi 0, %s130
      %s133 = sphi 0, %s132
      %s147 = sphi 0, %s133
      %s151 = sphi 0, %s151
      %s153 = sphi 0, %s151
      %s154 = sphi 0, %s153
      %s168 = sphi 0, %s154
      %s176 = sphi 0, %s178
      %s179 = sphi 0, %s176
      %s180 = sphi 0, %s179
      %s196 = sphi 0, %s180
      %s204 = sphi 0, %s206
      %s207 = sphi 0, %s204
      %s208 = sphi 0, %s207
      %s224 = sphi 0, %s208
      %s232 = sphi 0, %s234
      %s235 = sphi 0, %s232
      %s236 = sphi 0, %s235
      %s252 = sphi 0, %s236
    $region4: #{tpu_custom_call.1} parent=1 // loop_header_branch
      %29 = sbr.rel (%p27) target = $region8
    $region5: #{tpu_custom_call.1} parent=1 // loop_body
      %s31 = ssub.s32 %s26, 1
      %s32 = ssub.s32 %s26, 2
      %s39 = sadd.s32 1, %s34
      %p40 = scmp.ge.s32.totalorder %s39, 1
      %s41 = scalar_select %p40, 0, %s39
      %s42 = sadd.s32 1, %s33
      %s43 = scalar_select %p40, %s42, %s33
      %p44 = scmp.ge.s32.totalorder %s43, 2
      %s45 = scalar_select %p44, 0, %s43
      %s46 = ssub.s32 %s33, %s45
      %s47 = ssub.s32 %s34, %s41
      %s48 = sor.u32 %s46, %s47
      %p49 = scmp.eq.s32.totalorder %s48, 0
      %s51 = sadd.s32 %s50, 1
      %s52 = scalar_select %p49, %s50, %s51
      %p55 = pneg %p49
      %p56 = scmp.eq.s32.totalorder %s26, 1
      %p57 = por %p55, %p56
      %p58 = scmp.ne.s32.totalorder %s50, %s53
      %p59 = scmp.eq.s32.totalorder %s26, 0
      %p60 = por %p58, %p59
      %p61 = scmp.ne.s32.totalorder %s50, %s53
      %p62 = scmp.eq.s32.totalorder %s31, 1
      %p63 = por %p61, %p62
      %p64 = scmp.ne.s32.totalorder %s53, %s54
      %p65 = scmp.eq.s32.totalorder %s31, 0
      %p66 = por %p64, %p65
      %p67 = scmp.ne.s32.totalorder %s53, %s54
      %p68 = scmp.eq.s32.totalorder %s32, 1
      %p69 = por %p67, %p68
      %p71 = scmp.ne.s32.totalorder %s54, %s70
      %p72 = scmp.eq.s32.totalorder %s32, 0
      %p73 = por %p71, %p72
      %s74 = ssub.s32 %s33, %s45
      %s75 = ssub.s32 %s34, %s41
      %s76 = sor.u32 %s74, %s75
      %p77 = scmp.eq.s32.totalorder %s76, 0
      %s79 = sadd.s32 %s78, 1
      %s80 = scalar_select %p77, %s78, %s79
      %p83 = pneg %p77
      %p84 = scmp.eq.s32.totalorder %s26, 1
      %p85 = por %p83, %p84
      %p86 = scmp.ne.s32.totalorder %s78, %s81
      %p87 = scmp.eq.s32.totalorder %s26, 0
      %p88 = por %p86, %p87
      %p89 = scmp.ne.s32.totalorder %s78, %s81
      %p90 = scmp.eq.s32.totalorder %s31, 1
      %p91 = por %p89, %p90
      %p92 = scmp.ne.s32.totalorder %s81, %s82
      %p93 = scmp.eq.s32.totalorder %s31, 0
      %p94 = por %p92, %p93
      %p95 = scmp.ne.s32.totalorder %s81, %s82
      %p96 = scmp.eq.s32.totalorder %s32, 1
      %p97 = por %p95, %p96
      %p99 = scmp.ne.s32.totalorder %s82, %s98
      %p100 = scmp.eq.s32.totalorder %s32, 0
      %p101 = por %p99, %p100
      %s102 = ssub.s32 %s33, %s45
      %s103 = ssub.s32 %s34, %s41
      %s104 = sor.u32 %s102, %s103
      %p105 = scmp.eq.s32.totalorder %s104, 0
      %s107 = sadd.s32 %s106, 1
      %s108 = scalar_select %p105, %s106, %s107
      %p111 = pneg %p105
      %p112 = scmp.eq.s32.totalorder %s26, 1
      %p113 = por %p111, %p112
      %p114 = scmp.ne.s32.totalorder %s106, %s109
      %p115 = scmp.eq.s32.totalorder %s26, 0
      %p116 = por %p114, %p115
      %p117 = scmp.ne.s32.totalorder %s106, %s109
      %p118 = scmp.eq.s32.totalorder %s31, 1
      %p119 = por %p117, %p118
      %p120 = scmp.ne.s32.totalorder %s109, %s110
      %p121 = scmp.eq.s32.totalorder %s31, 0
      %p122 = por %p120, %p121
      %p123 = scmp.ne.s32.totalorder %s109, %s110
      %p124 = scmp.eq.s32.totalorder %s32, 1
      %p125 = por %p123, %p124
      %p127 = scmp.ne.s32.totalorder %s110, %s126
      %p128 = scmp.eq.s32.totalorder %s32, 0
      %p129 = por %p127, %p128
      %s131 = sadd.s32 %s130, 1
      %p134 = scmp.eq.s32.totalorder %s26, 1
      %p135 = scmp.ne.s32.totalorder %s130, %s132
      %p136 = scmp.eq.s32.totalorder %s26, 0
      %p137 = por %p135, %p136
      %p138 = scmp.ne.s32.totalorder %s130, %s132
      %p139 = scmp.eq.s32.totalorder %s31, 1
      %p140 = por %p138, %p139
      %p141 = scmp.ne.s32.totalorder %s132, %s133
      %p142 = scmp.eq.s32.totalorder %s31, 0
      %p143 = por %p141, %p142
      %p144 = scmp.ne.s32.totalorder %s132, %s133
      %p145 = scmp.eq.s32.totalorder %s32, 1
      %p146 = por %p144, %p145
      %p148 = scmp.ne.s32.totalorder %s133, %s147
      %p149 = scmp.eq.s32.totalorder %s32, 0
      %p150 = por %p148, %p149
      %s152 = sadd.s32 %s151, 1
      %p155 = scmp.eq.s32.totalorder %s26, 1
      %p156 = scmp.ne.s32.totalorder %s151, %s153
      %p157 = scmp.eq.s32.totalorder %s26, 0
      %p158 = por %p156, %p157
      %p159 = scmp.ne.s32.totalorder %s151, %s153
      %p160 = scmp.eq.s32.totalorder %s31, 1
      %p161 = por %p159, %p160
      %p162 = scmp.ne.s32.totalorder %s153, %s154
      %p163 = scmp.eq.s32.totalorder %s31, 0
      %p164 = por %p162, %p163
      %p165 = scmp.ne.s32.totalorder %s153, %s154
      %p166 = scmp.eq.s32.totalorder %s32, 1
      %p167 = por %p165, %p166
      %p169 = scmp.ne.s32.totalorder %s154, %s168
      %p170 = scmp.eq.s32.totalorder %s32, 0
      %p171 = por %p169, %p170
      %s172 = ssub.s32 %s33, %s45
      %s173 = ssub.s32 %s34, %s41
      %s174 = sor.u32 %s172, %s173
      %p175 = scmp.eq.s32.totalorder %s174, 0
      %s177 = sadd.s32 %s176, 1
      %s178 = scalar_select %p175, %s176, %s177
      %p181 = pneg %p175
      %p182 = scmp.eq.s32.totalorder %s26, 1
      %p183 = por %p181, %p182
      %p184 = scmp.ne.s32.totalorder %s176, %s179
      %p185 = scmp.eq.s32.totalorder %s26, 0
      %p186 = por %p184, %p185
      %p187 = scmp.ne.s32.totalorder %s176, %s179
      %p188 = scmp.eq.s32.totalorder %s31, 1
      %p189 = por %p187, %p188
      %p190 = scmp.ne.s32.totalorder %s179, %s180
      %p191 = scmp.eq.s32.totalorder %s31, 0
      %p192 = por %p190, %p191
      %p193 = scmp.ne.s32.totalorder %s179, %s180
      %p194 = scmp.eq.s32.totalorder %s32, 1
      %p195 = por %p193, %p194
      %p197 = scmp.ne.s32.totalorder %s180, %s196
      %p198 = scmp.eq.s32.totalorder %s32, 0
      %p199 = por %p197, %p198
      %s200 = ssub.s32 %s33, %s45
      %s201 = ssub.s32 %s34, %s41
      %s202 = sor.u32 %s200, %s201
      %p203 = scmp.eq.s32.totalorder %s202, 0
      %s205 = sadd.s32 %s204, 1
      %s206 = scalar_select %p203, %s204, %s205
      %p209 = pneg %p203
      %p210 = scmp.eq.s32.totalorder %s26, 1
      %p211 = por %p209, %p210
      %p212 = scmp.ne.s32.totalorder %s204, %s207
      %p213 = scmp.eq.s32.totalorder %s26, 0
      %p214 = por %p212, %p213
      %p215 = scmp.ne.s32.totalorder %s204, %s207
      %p216 = scmp.eq.s32.totalorder %s31, 1
      %p217 = por %p215, %p216
      %p218 = scmp.ne.s32.totalorder %s207, %s208
      %p219 = scmp.eq.s32.totalorder %s31, 0
      %p220 = por %p218, %p219
      %p221 = scmp.ne.s32.totalorder %s207, %s208
      %p222 = scmp.eq.s32.totalorder %s32, 1
      %p223 = por %p221, %p222
      %p225 = scmp.ne.s32.totalorder %s208, %s224
      %p226 = scmp.eq.s32.totalorder %s32, 0
      %p227 = por %p225, %p226
      %s228 = ssub.s32 %s33, %s45
      %s229 = ssub.s32 %s34, %s41
      %s230 = sor.u32 %s228, %s229
      %p231 = scmp.eq.s32.totalorder %s230, 0
      %s233 = sadd.s32 %s232, 1
      %s234 = scalar_select %p231, %s232, %s233
      %p237 = pneg %p231
      %p238 = scmp.eq.s32.totalorder %s26, 1
      %p239 = por %p237, %p238
      %p240 = scmp.ne.s32.totalorder %s232, %s235
      %p241 = scmp.eq.s32.totalorder %s26, 0
      %p242 = por %p240, %p241
      %p243 = scmp.ne.s32.totalorder %s232, %s235
      %p244 = scmp.eq.s32.totalorder %s31, 1
      %p245 = por %p243, %p244
      %p246 = scmp.ne.s32.totalorder %s235, %s236
      %p247 = scmp.eq.s32.totalorder %s31, 0
      %p248 = por %p246, %p247
      %p249 = scmp.ne.s32.totalorder %s235, %s236
      %p250 = scmp.eq.s32.totalorder %s32, 1
      %p251 = por %p249, %p250
      %p253 = scmp.ne.s32.totalorder %s236, %s252
      %p254 = scmp.eq.s32.totalorder %s32, 0
      %p255 = por %p253, %p254
      %p256 = scmp.le.s32.totalorder 1, %s26
      %p257 = scmp.lt.s32.totalorder %s26, 3
      %p258 = pnand %p256, %p257
      %p259 = pneg %p258
      // Predicated region
      $region9: #{tpu_custom_call.1} parent=5 // pred_check
        _
      $region10: #{tpu_custom_call.1} parent=5 // pred_check_branch
        %261 = sbr.rel (%p258) target = $region12
      $region11: #{tpu_custom_call.1} parent=5 // pred_region
        %s262 = ssub.s32 %s26, 1
        // Predicated region
        $region13: #{tpu_custom_call.1} parent=11 // pred_check
          %p263 = pneg %p143
        $region14: #{tpu_custom_call.1} parent=11 // pred_check_branch
          %265 = sbr.rel (%p263) target = $region16
        $region15: #{tpu_custom_call.1} parent=11 // pred_region
          _
        $region16: #{tpu_custom_call.1} parent=11 // pred_fallthru
          _
        // Predicated region
        $region17: #{tpu_custom_call.1} parent=11 // pred_check
          %p266 = pneg %p164
        $region18: #{tpu_custom_call.1} parent=11 // pred_check_branch
          %268 = sbr.rel (%p266) target = $region20
        $region19: #{tpu_custom_call.1} parent=11 // pred_region
          _
        $region20: #{tpu_custom_call.1} parent=11 // pred_fallthru
          _
      $region12: #{tpu_custom_call.1} parent=5 // pred_fallthru
        _
      %p269 = scmp.lt.s32.totalorder %s26, 2
      // Predicated region
      $region21: #{tpu_custom_call.1} parent=5 // pred_check
        %p270 = pneg %p269
      $region22: #{tpu_custom_call.1} parent=5 // pred_check_branch
        %272 = sbr.rel (%p270) target = $region24
      $region23: #{tpu_custom_call.1} parent=5 // pred_region
        // Predicated region
        $region25: #{tpu_custom_call.1} parent=23 // pred_check
          %p273 = pneg %p60
        $region26: #{tpu_custom_call.1} parent=23 // pred_check_branch
          %275 = sbr.rel (%p273) target = $region28
        $region27: #{tpu_custom_call.1} parent=23 // pred_region
          %s276 = sand.u32 %s50, 1
          %s277 = scalar_lea.sflag [#allocation3], %s276
          %s278 = sand.u32 %s50, 1
          %s279 = smul.addr %s278, 16
          %s280 = scalar_lea.vmem [#allocation2], %s279
          %s281 = smul.u32 2, %s34
          %283 = vsyncadd %s277, 0
          %s284 = smul.addr %s33, 2
          %s285 = sadd.s32 %s281, %s284
          %s286 = smul.addr %s285, 8
          %s287 = scalar_lea.hbm %s0, %s286
          %s289 = sshll.u32 %s287, 4
          %s290 = int_to_ptr.hbm [resolvable:$true] %s289
          %s291 = sshll.u32 %s280, 4
          %s292 = int_to_ptr.vmem [resolvable:$true] %s291
          %294 = dma.hbm_to_vmem [thread:$0]  %s290, 256, %s292, %s277
        $region28: #{tpu_custom_call.1} parent=23 // pred_fallthru
          _
        // Predicated region
        $region29: #{tpu_custom_call.1} parent=23 // pred_check
          %p295 = pneg %p88
        $region30: #{tpu_custom_call.1} parent=23 // pred_check_branch
          %297 = sbr.rel (%p295) target = $region32
        $region31: #{tpu_custom_call.1} parent=23 // pred_region
          %s298 = sand.u32 %s26, 1
          %s299 = scalar_lea.sflag [#allocation6], %s298
          %s300 = sand.u32 %s78, 1
          %s301 = smul.addr %s300, 16
          %s302 = scalar_lea.vmem [#allocation5], %s301
          %s303 = smul.u32 2, %s34
          %305 = vsyncadd %s299, 0
          %s306 = smul.addr %s33, 2
          %s307 = sadd.s32 %s303, %s306
          %s308 = smul.addr %s307, 8
          %s309 = scalar_lea.hbm %s1, %s308
          %s311 = sshll.u32 %s309, 4
          %s312 = int_to_ptr.hbm [resolvable:$true] %s311
          %s313 = sshll.u32 %s302, 4
          %s314 = int_to_ptr.vmem [resolvable:$true] %s313
          %316 = dma.hbm_to_vmem [thread:$0]  %s312, 256, %s314, %s299
        $region32: #{tpu_custom_call.1} parent=23 // pred_fallthru
          _
        // Predicated region
        $region33: #{tpu_custom_call.1} parent=23 // pred_check
          %p317 = pneg %p116
        $region34: #{tpu_custom_call.1} parent=23 // pred_check_branch
          %319 = sbr.rel (%p317) target = $region36
        $region35: #{tpu_custom_call.1} parent=23 // pred_region
          %s320 = sand.u32 %s26, 1
          %s321 = scalar_lea.sflag [#allocation6], %s320
          %s322 = sand.u32 %s106, 1
          %s323 = smul.addr %s322, 16
          %s324 = scalar_lea.vmem [#allocation7], %s323
          %s325 = smul.u32 2, %s34
          %327 = vsyncadd %s321, 0
          %s328 = smul.addr %s33, 2
          %s329 = sadd.s32 %s325, %s328
          %s330 = smul.addr %s329, 8
          %s331 = scalar_lea.hbm %s2, %s330
          %s333 = sshll.u32 %s331, 4
          %s334 = int_to_ptr.hbm [resolvable:$true] %s333
          %s335 = sshll.u32 %s324, 4
          %s336 = int_to_ptr.vmem [resolvable:$true] %s335
          %338 = dma.hbm_to_vmem [thread:$0]  %s334, 256, %s336, %s321
        $region36: #{tpu_custom_call.1} parent=23 // pred_fallthru
          _
      $region24: #{tpu_custom_call.1} parent=5 // pred_fallthru
        _
      %p339 = scmp.le.s32.totalorder 1, %s26
      %p340 = scmp.lt.s32.totalorder %s26, 3
      %p341 = pnand %p339, %p340
      %p342 = pneg %p341
      // Predicated region
      $region37: #{tpu_custom_call.1} parent=5 // pred_check
        _
      $region38: #{tpu_custom_call.1} parent=5 // pred_check_branch
        %344 = sbr.rel (%p341) target = $region40
      $region39: #{tpu_custom_call.1} parent=5 // pred_region
        %s345 = ssub.s32 %s26, 1
        %s346 = sand.u32 %s53, 1
        %s347 = scalar_lea.sflag [#allocation3], %s346
        %s348 = sand.u32 %s53, 1
        %s349 = smul.addr %s348, 16
        %s350 = scalar_lea.vmem [#allocation2], %s349
        // Predicated region
        $region41: #{tpu_custom_call.1} parent=39 // pred_check
          %p351 = pneg %p66
        $region42: #{tpu_custom_call.1} parent=39 // pred_check_branch
          %353 = sbr.rel (%p351) target = $region44
        $region43: #{tpu_custom_call.1} parent=39 // pred_region
          %355 = dma.done %s347, 256
        $region44: #{tpu_custom_call.1} parent=39 // pred_fallthru
          _
        %s356 = sand.u32 %s31, 1
        %s357 = scalar_lea.sflag [#allocation6], %s356
        %s358 = sand.u32 %s81, 1
        %s359 = smul.addr %s358, 16
        %s360 = scalar_lea.vmem [#allocation5], %s359
        // Predicated region
        $region45: #{tpu_custom_call.1} parent=39 // pred_check
          %p361 = pneg %p94
        $region46: #{tpu_custom_call.1} parent=39 // pred_check_branch
          %363 = sbr.rel (%p361) target = $region48
        $region47: #{tpu_custom_call.1} parent=39 // pred_region
          %365 = dma.done %s357, 256
        $region48: #{tpu_custom_call.1} parent=39 // pred_fallthru
          _
        %s366 = sand.u32 %s31, 1
        %s367 = scalar_lea.sflag [#allocation6], %s366
        %s368 = sand.u32 %s109, 1
        %s369 = smul.addr %s368, 16
        %s370 = scalar_lea.vmem [#allocation7], %s369
        // Predicated region
        $region49: #{tpu_custom_call.1} parent=39 // pred_check
          %p371 = pneg %p122
        $region50: #{tpu_custom_call.1} parent=39 // pred_check_branch
          %373 = sbr.rel (%p371) target = $region52
        $region51: #{tpu_custom_call.1} parent=39 // pred_region
          %375 = dma.done %s367, 256
        $region52: #{tpu_custom_call.1} parent=39 // pred_fallthru
          _
        %s376 = sand.u32 %s53, 1
        %s377 = scalar_lea.sflag [#allocation3], %s376
        %s378 = sand.u32 %s53, 1
        %s379 = smul.addr %s378, 16
        %s380 = scalar_lea.vmem [#allocation2], %s379
        %p381 = pneg %p66
        %p382 = pneg %p63
        %s383 = sand.u32 %s31, 1
        %s384 = scalar_lea.sflag [#allocation6], %s383
        %s385 = sand.u32 %s81, 1
        %s386 = smul.addr %s385, 16
        %s387 = scalar_lea.vmem [#allocation5], %s386
        %p388 = pneg %p94
        %p389 = pneg %p91
        %s390 = sand.u32 %s31, 1
        %s391 = scalar_lea.sflag [#allocation6], %s390
        %s392 = sand.u32 %s109, 1
        %s393 = smul.addr %s392, 16
        %s394 = scalar_lea.vmem [#allocation7], %s393
        %p395 = pneg %p122
        %p396 = pneg %p119
        %p397 = pneg %p143
        %p398 = pneg %p140
        %p399 = pneg %p164
        %p400 = pneg %p161
        %p401 = pneg %p192
        %p402 = pneg %p189
        %s403 = sand.u32 %s179, 1
        %s404 = scalar_lea.sflag [#allocation4], %s403
        %s405 = sand.u32 %s179, 1
        %s406 = smul.addr %s405, 16
        %s407 = scalar_lea.vmem [#allocation8], %s406
        %p408 = pneg %p220
        %p409 = pneg %p217
        %s410 = sand.u32 %s31, 1
        %s411 = scalar_lea.sflag [#allocation10], %s410
        %s412 = sand.u32 %s207, 1
        %s413 = smul.addr %s412, 16
        %s414 = scalar_lea.vmem [#allocation9], %s413
        %p415 = pneg %p248
        %p416 = pneg %p245
        %s417 = sand.u32 %s31, 1
        %s418 = scalar_lea.sflag [#allocation10], %s417
        %s419 = sand.u32 %s235, 1
        %s420 = smul.addr %s419, 16
        %s421 = scalar_lea.vmem [#allocation11], %s420
        %s422 = smul.u32 2, %s36
        %s423 = smul.u32 2, %s36
        %s424 = smul.u32 2, %s36
        %s425 = smul.u32 2, %s36
        %s426 = smul.u32 2, %s36
        %s427 = smul.u32 2, %s36
        %v428 = vld [vmem:[%s3] sm:$0xff]
        %v429 = vld [vmem:[%s350] sm:$0xff]
        %v430 = vld [vmem:[%s350 + $0x8] sm:$0xff]
        %v431 = vld [vmem:[%s4] sm:$0xff]
        %433 = vset.pattern.permute.xlu0 0
        %434 = vperm.xlu0 %433, %v431
        %v435 = vpop.permute.xlu0 %434
        %vm437 = vcmask 64512
        %v439 = vsel %vm437, %v428, 0
        %441 = vmatpush.msra.mxu0 0.0
        %442 = vmatpush.msra.mxu0 0.0
        %443 = vmatpush.msra.mxu0 0.0
        %444 = vmatpush.msra.mxu0 0.0
        %445 = vmatpush.msra.mxu0 0.0
        %446 = vmatpush.msra.mxu0 0.0
        %447 = vmatpush.msra.mxu0 0.0
        %448 = vmatpush.msra.mxu0 0.0
        %449 = vmatpush.msra.mxu0 0.0
        %450 = vmatpush.msra.mxu0 0.0
        %451 = vmatpush.msra.mxu0 0.0
        %452 = vmatpush.msra.mxu0 0.0
        %453 = vmatpush.msra.mxu0 0.0
        %454 = vmatpush.msra.mxu0 0.0
        %455 = vmatpush.msra.mxu0 0.0
        %456 = vmatpush.msra.mxu0 %v429
        %457 = vmatmul.f32.gmra.mxu0 %v439
        %v458 = vpop.f32.mrf.mxu0
        %v459 = vadd.f32 %v435, %v458
        %460 = vdwg.mxu0
        %461 = vmatpush.msra.mxu0 0.0
        %462 = vmatpush.msra.mxu0 0.0
        %463 = vmatpush.msra.mxu0 0.0
        %464 = vmatpush.msra.mxu0 0.0
        %465 = vmatpush.msra.mxu0 0.0
        %466 = vmatpush.msra.mxu0 0.0
        %467 = vmatpush.msra.mxu0 0.0
        %468 = vmatpush.msra.mxu0 0.0
        %469 = vmatpush.msra.mxu0 0.0
        %470 = vmatpush.msra.mxu0 0.0
        %471 = vmatpush.msra.mxu0 0.0
        %472 = vmatpush.msra.mxu0 0.0
        %473 = vmatpush.msra.mxu0 0.0
        %474 = vmatpush.msra.mxu0 0.0
        %475 = vmatpush.msra.mxu0 0.0
        %476 = vmatpush.msra.mxu0 %v430
        %477 = vmatmul.f32.gmra.mxu0 %v439
        %v478 = vpop.f32.mrf.mxu0
        %v479 = vadd.f32 %v435, %v478
        %480 = vdwg.mxu0
        %481 = vst [vmem:[%s407] sm:$0xff] %v459
        %482 = vst [vmem:[%s407 + $0x8] sm:$0xff] %v479
        %s483 = scalar_lea.vmem %s3, 8
        %v484 = vld [vmem:[%s483] sm:$0xff]
        %v485 = vld [vmem:[%s360] sm:$0xff]
        %v486 = vld [vmem:[%s360 + $0x8] sm:$0xff]
        %s487 = scalar_lea.vmem %s4, 8
        %v488 = vld [vmem:[%s487] sm:$0xff]
        %490 = vset.pattern.permute.xlu0 0
        %491 = vperm.xlu0 %490, %v488
        %v492 = vpop.permute.xlu0 %491
        %v495 = vsel %vm437, %v484, 0
        %497 = vmatpush.msra.mxu0 0.0
        %498 = vmatpush.msra.mxu0 0.0
        %499 = vmatpush.msra.mxu0 0.0
        %500 = vmatpush.msra.mxu0 0.0
        %501 = vmatpush.msra.mxu0 0.0
        %502 = vmatpush.msra.mxu0 0.0
        %503 = vmatpush.msra.mxu0 0.0
        %504 = vmatpush.msra.mxu0 0.0
        %505 = vmatpush.msra.mxu0 0.0
        %506 = vmatpush.msra.mxu0 0.0
        %507 = vmatpush.msra.mxu0 0.0
        %508 = vmatpush.msra.mxu0 0.0
        %509 = vmatpush.msra.mxu0 0.0
        %510 = vmatpush.msra.mxu0 0.0
        %511 = vmatpush.msra.mxu0 0.0
        %512 = vmatpush.msra.mxu0 %v485
        %513 = vmatmul.f32.gmra.mxu0 %v495
        %v514 = vpop.f32.mrf.mxu0
        %v515 = vadd.f32 %v492, %v514
        %516 = vdwg.mxu0
        %517 = vmatpush.msra.mxu0 0.0
        %518 = vmatpush.msra.mxu0 0.0
        %519 = vmatpush.msra.mxu0 0.0
        %520 = vmatpush.msra.mxu0 0.0
        %521 = vmatpush.msra.mxu0 0.0
        %522 = vmatpush.msra.mxu0 0.0
        %523 = vmatpush.msra.mxu0 0.0
        %524 = vmatpush.msra.mxu0 0.0
        %525 = vmatpush.msra.mxu0 0.0
        %526 = vmatpush.msra.mxu0 0.0
        %527 = vmatpush.msra.mxu0 0.0
        %528 = vmatpush.msra.mxu0 0.0
        %529 = vmatpush.msra.mxu0 0.0
        %530 = vmatpush.msra.mxu0 0.0
        %531 = vmatpush.msra.mxu0 0.0
        %532 = vmatpush.msra.mxu0 %v486
        %533 = vmatmul.f32.gmra.mxu0 %v495
        %v534 = vpop.f32.mrf.mxu0
        %v535 = vadd.f32 %v492, %v534
        %536 = vdwg.mxu0
        %537 = vst [vmem:[%s414] sm:$0xff] %v515
        %538 = vst [vmem:[%s414 + $0x8] sm:$0xff] %v535
        %s539 = scalar_lea.vmem %s3, 16
        %v540 = vld [vmem:[%s539] sm:$0xff]
        %v541 = vld [vmem:[%s370] sm:$0xff]
        %v542 = vld [vmem:[%s370 + $0x8] sm:$0xff]
        %s543 = scalar_lea.vmem %s4, 16
        %v544 = vld [vmem:[%s543] sm:$0xff]
        %546 = vset.pattern.permute.xlu0 0
        %547 = vperm.xlu0 %546, %v544
        %v548 = vpop.permute.xlu0 %547
        %v551 = vsel %vm437, %v540, 0
        %553 = vmatpush.msra.mxu0 0.0
        %554 = vmatpush.msra.mxu0 0.0
        %555 = vmatpush.msra.mxu0 0.0
        %556 = vmatpush.msra.mxu0 0.0
        %557 = vmatpush.msra.mxu0 0.0
        %558 = vmatpush.msra.mxu0 0.0
        %559 = vmatpush.msra.mxu0 0.0
        %560 = vmatpush.msra.mxu0 0.0
        %561 = vmatpush.msra.mxu0 0.0
        %562 = vmatpush.msra.mxu0 0.0
        %563 = vmatpush.msra.mxu0 0.0
        %564 = vmatpush.msra.mxu0 0.0
        %565 = vmatpush.msra.mxu0 0.0
        %566 = vmatpush.msra.mxu0 0.0
        %567 = vmatpush.msra.mxu0 0.0
        %568 = vmatpush.msra.mxu0 %v541
        %569 = vmatmul.f32.gmra.mxu0 %v551
        %v570 = vpop.f32.mrf.mxu0
        %v571 = vadd.f32 %v548, %v570
        %572 = vdwg.mxu0
        %573 = vmatpush.msra.mxu0 0.0
        %574 = vmatpush.msra.mxu0 0.0
        %575 = vmatpush.msra.mxu0 0.0
        %576 = vmatpush.msra.mxu0 0.0
        %577 = vmatpush.msra.mxu0 0.0
        %578 = vmatpush.msra.mxu0 0.0
        %579 = vmatpush.msra.mxu0 0.0
        %580 = vmatpush.msra.mxu0 0.0
        %581 = vmatpush.msra.mxu0 0.0
        %582 = vmatpush.msra.mxu0 0.0
        %583 = vmatpush.msra.mxu0 0.0
        %584 = vmatpush.msra.mxu0 0.0
        %585 = vmatpush.msra.mxu0 0.0
        %586 = vmatpush.msra.mxu0 0.0
        %587 = vmatpush.msra.mxu0 0.0
        %588 = vmatpush.msra.mxu0 %v542
        %589 = vmatmul.f32.gmra.mxu0 %v551
        %v590 = vpop.f32.mrf.mxu0
        %v591 = vadd.f32 %v548, %v590
        %592 = vdwg.mxu0
        %593 = vst [vmem:[%s421] sm:$0xff] %v571
        %594 = vst [vmem:[%s421 + $0x8] sm:$0xff] %v591
        %s595 = sand.u32 %s179, 1
        %s596 = scalar_lea.sflag [#allocation4], %s595
        %s597 = sand.u32 %s179, 1
        %s598 = smul.addr %s597, 16
        %s599 = scalar_lea.vmem [#allocation8], %s598
        %s600 = sand.u32 %s31, 1
        %s601 = scalar_lea.sflag [#allocation10], %s600
        %s602 = sand.u32 %s207, 1
        %s603 = smul.addr %s602, 16
        %s604 = scalar_lea.vmem [#allocation9], %s603
        %s605 = sand.u32 %s31, 1
        %s606 = scalar_lea.sflag [#allocation10], %s605
        %s607 = sand.u32 %s235, 1
        %s608 = smul.addr %s607, 16
        %s609 = scalar_lea.vmem [#allocation11], %s608
        // Predicated region
        $region53: #{tpu_custom_call.1} parent=39 // pred_check
          %p610 = pneg %p189
        $region54: #{tpu_custom_call.1} parent=39 // pred_check_branch
          %612 = sbr.rel (%p610) target = $region56
        $region55: #{tpu_custom_call.1} parent=39 // pred_region
          %s613 = smul.u32 2, %s36
          %615 = vsyncadd %s596, 0
          %s616 = smul.addr %s35, 2
          %s617 = sadd.s32 %s613, %s616
          %s618 = smul.addr %s617, 8
          %s619 = scalar_lea.hbm %s5, %s618
          %s621 = sshll.u32 %s599, 4
          %s622 = int_to_ptr.vmem [resolvable:$true] %s621
          %s623 = sshll.u32 %s619, 4
          %s624 = int_to_ptr.hbm [resolvable:$true] %s623
          %626 = dma.vmem_to_hbm [thread:$0]  %s622, 256, %s624, %s596
        $region56: #{tpu_custom_call.1} parent=39 // pred_fallthru
          _
        // Predicated region
        $region57: #{tpu_custom_call.1} parent=39 // pred_check
          %p627 = pneg %p217
        $region58: #{tpu_custom_call.1} parent=39 // pred_check_branch
          %629 = sbr.rel (%p627) target = $region60
        $region59: #{tpu_custom_call.1} parent=39 // pred_region
          %s630 = smul.u32 2, %s36
          %632 = vsyncadd %s601, 0
          %s633 = smul.addr %s35, 2
          %s634 = sadd.s32 %s630, %s633
          %s635 = smul.addr %s634, 8
          %s636 = scalar_lea.hbm %s6, %s635
          %s638 = sshll.u32 %s604, 4
          %s639 = int_to_ptr.vmem [resolvable:$true] %s638
          %s640 = sshll.u32 %s636, 4
          %s641 = int_to_ptr.hbm [resolvable:$true] %s640
          %643 = dma.vmem_to_hbm [thread:$0]  %s639, 256, %s641, %s601
        $region60: #{tpu_custom_call.1} parent=39 // pred_fallthru
          _
        // Predicated region
        $region61: #{tpu_custom_call.1} parent=39 // pred_check
          %p644 = pneg %p245
        $region62: #{tpu_custom_call.1} parent=39 // pred_check_branch
          %646 = sbr.rel (%p644) target = $region64
        $region63: #{tpu_custom_call.1} parent=39 // pred_region
          %s647 = smul.u32 2, %s36
          %649 = vsyncadd %s606, 0
          %s650 = smul.addr %s35, 2
          %s651 = sadd.s32 %s647, %s650
          %s652 = smul.addr %s651, 8
          %s653 = scalar_lea.hbm %s7, %s652
          %s655 = sshll.u32 %s609, 4
          %s656 = int_to_ptr.vmem [resolvable:$true] %s655
          %s657 = sshll.u32 %s653, 4
          %s658 = int_to_ptr.hbm [resolvable:$true] %s657
          %660 = dma.vmem_to_hbm [thread:$0]  %s656, 256, %s658, %s606
        $region64: #{tpu_custom_call.1} parent=39 // pred_fallthru
          _
      $region40: #{tpu_custom_call.1} parent=5 // pred_fallthru
        _
      %p661 = scmp.le.s32.totalorder 2, %s26
      // Predicated region
      $region65: #{tpu_custom_call.1} parent=5 // pred_check
        %p662 = pneg %p661
      $region66: #{tpu_custom_call.1} parent=5 // pred_check_branch
        %664 = sbr.rel (%p662) target = $region68
      $region67: #{tpu_custom_call.1} parent=5 // pred_region
        %s665 = ssub.s32 %s26, 2
        // Predicated region
        $region69: #{tpu_custom_call.1} parent=67 // pred_check
          %p666 = pneg %p195
        $region70: #{tpu_custom_call.1} parent=67 // pred_check_branch
          %668 = sbr.rel (%p666) target = $region72
        $region71: #{tpu_custom_call.1} parent=67 // pred_region
          %s669 = sand.u32 %s180, 1
          %s670 = scalar_lea.sflag [#allocation4], %s669
          %s671 = sand.u32 %s180, 1
          %s672 = smul.addr %s671, 16
          %s673 = scalar_lea.vmem [#allocation8], %s672
          %675 = dma.done %s670, 256
        $region72: #{tpu_custom_call.1} parent=67 // pred_fallthru
          _
        // Predicated region
        $region73: #{tpu_custom_call.1} parent=67 // pred_check
          %p676 = pneg %p223
        $region74: #{tpu_custom_call.1} parent=67 // pred_check_branch
          %678 = sbr.rel (%p676) target = $region76
        $region75: #{tpu_custom_call.1} parent=67 // pred_region
          %s679 = sand.u32 %s32, 1
          %s680 = scalar_lea.sflag [#allocation10], %s679
          %s681 = sand.u32 %s208, 1
          %s682 = smul.addr %s681, 16
          %s683 = scalar_lea.vmem [#allocation9], %s682
          %685 = dma.done %s680, 256
        $region76: #{tpu_custom_call.1} parent=67 // pred_fallthru
          _
        // Predicated region
        $region77: #{tpu_custom_call.1} parent=67 // pred_check
          %p686 = pneg %p251
        $region78: #{tpu_custom_call.1} parent=67 // pred_check_branch
          %688 = sbr.rel (%p686) target = $region80
        $region79: #{tpu_custom_call.1} parent=67 // pred_region
          %s689 = sand.u32 %s32, 1
          %s690 = scalar_lea.sflag [#allocation10], %s689
          %s691 = sand.u32 %s236, 1
          %s692 = smul.addr %s691, 16
          %s693 = scalar_lea.vmem [#allocation11], %s692
          %695 = dma.done %s690, 256
        $region80: #{tpu_custom_call.1} parent=67 // pred_fallthru
          _
      $region68: #{tpu_custom_call.1} parent=5 // pred_fallthru
        _
    $region6: #{tpu_custom_call.1} parent=1 // loop_footer
      %s30 = sadd.s32 1, %s26
    $region7: #{tpu_custom_call.1} parent=1 // loop_footer_branch
      %25 = sbr.rel target = $region3
    $region8: #{tpu_custom_call.1} parent=1 // loop_exit
      _
    %696 = vsyncpa [#allocation3], 1
    %s697 = scalar_lea.sflag [#allocation3], 1
    %698 = vsyncpa %s697, 1
    %699 = vsyncpa [#allocation6], 1
    %s700 = scalar_lea.sflag [#allocation6], 1
    %701 = vsyncpa %s700, 1
    %702 = vsyncpa [#allocation4], 1
    %s703 = scalar_lea.sflag [#allocation4], 1
    %704 = vsyncpa %s703, 1
    %705 = vsyncpa [#allocation10], 1
    %s706 = scalar_lea.sflag [#allocation10], 1
    %707 = vsyncpa %s706, 1

</llo_original>
